<compile_context>
chip_gen: v7x
topology: tpu7x:2x2x1
jax: 0.10.0
libtpu: 0.0.40
codegen_flags: <defaults>
</compile_context>

<pallas_src>
import functools

import jax
import jax.numpy as jnp
from jax.experimental import pallas as pl
from jax.experimental.pallas import tpu as pltpu


def _cdiv(a, b):
    return -(-a // b)


def _sequence_loss_kernel(w_ref,       # SMEM (N,) f32: gamma^(N-1-i)
                          preds_ref,   # VMEM (1, B, C, TH, W) wire dtype
                          gt_ref,      # VMEM (B, C, TH, W)    wire dtype
                          valid_ref,   # VMEM (B, 1, TH, W)    wire dtype
                          out_ref,     # VMEM (1, 8, 128) f32  per-tile partial
                          mask_ref,    # VMEM (B, 1, TH, W) f32 scratch
                          acc_ref,     # VMEM (8, 128) f32 scratch
                          *, max_flow_sq, h_total, tile_h):
    h = pl.program_id(0)
    n = pl.program_id(1)

    # Hoisted once per H tile: sqrt-free valid mask (plus row-in-bounds for a
    # partial last tile) and accumulator reset.
    @pl.when(n == 0)
    def _init():
        gt = gt_ref[...].astype(jnp.float32)                        # (B,C,TH,W)
        mag_sq = jnp.sum(gt * gt, axis=1, keepdims=True)            # (B,1,TH,W)
        ok = (valid_ref[...].astype(jnp.float32) >= 0.5) & (mag_sq < max_flow_sq)
        rows = jax.lax.broadcasted_iota(
            jnp.int32, (mask_ref.shape[2], mask_ref.shape[3]), 0)   # (TH,W)
        ok &= (rows + h * tile_h) < h_total
        mask_ref[...] = ok.astype(jnp.float32)
        acc_ref[...] = jnp.zeros_like(acc_ref)

    # Per-prediction: mask via select (garbage-safe), reduce to a scalar and
    # accumulate the weighted partial.  No full-size scratch, no vector store.
    pred = preds_ref[0].astype(jnp.float32)                         # (B,C,TH,W)
    diff = jnp.abs(pred - gt_ref[...].astype(jnp.float32))
    masked = jnp.where(mask_ref[...] > 0.0, diff, 0.0)
    acc_ref[...] += w_ref[n] * jnp.sum(masked)

    @pl.when(n == pl.num_programs(1) - 1)
    def _done():
        out_ref[0] = acc_ref[...]


def _vmem_capacity_bytes():
    try:
        info = pltpu.get_tpu_info()
        cap = getattr(info, "vmem_capacity_bytes", None)
        if cap:
            return int(cap)
    except Exception:
        pass
    return 64 << 20          # conservative default = v7x per-TensorCore VMEM


def _pick_tile_h(H, W, B, C, pred_isz, gt_isz, valid_isz, budget_bytes):
    """Tile height: multiple of the sublane granule, sized to the VMEM budget,
    and capped so that >= 2 tiles exist (megacore sharding of the H axis)."""
    w_pad = _cdiv(W, 128) * 128                      # lane padding inside VMEM
    min_isz = max(1, min(pred_isz, gt_isz, valid_isz))
    gran = 8 * max(1, 4 // min_isz)                  # 8 (f32) / 16 (bf16) / 32 (i8)

    def footprint(th):
        return (2 * B * C * th * w_pad * pred_isz    # double-buffered preds
                + 2 * B * C * th * w_pad * gt_isz    # double-buffered gt
                + 2 * B * 1 * th * w_pad * valid_isz # double-buffered valid
                + B * 1 * th * w_pad * 4             # f32 mask scratch
                + (256 << 10))                       # acc / out blocks + slack

    if H <= gran:
        return H                                     # single full-height tile

    th = max(gran, (H // gran) * gran)
    while th > gran and footprint(th) > budget_bytes:
        th -= gran

    # Keep at least two H tiles so the "parallel" axis can feed both
    # TensorCores on v7x (negligible cost on single-core parts).
    th_split = _cdiv(_cdiv(H, 2), gran) * gran
    if th_split < H:
        th = min(th, th_split)

    # Balance tile sizes for the resulting tile count.
    n_h = _cdiv(H, th)
    th_bal = _cdiv(_cdiv(H, n_h), gran) * gran
    if gran <= th_bal <= th:
        th = th_bal
    return th


def sequence_loss_pallas(flow_preds, flow_gt, valid, *, gamma, max_flow):
    """flow_preds: (N,B,2,H,W); flow_gt: (B,2,H,W); valid: (B,1,H,W) -> scalar."""
    N, B, C, H, W = flow_preds.shape
    assert flow_gt.shape == (B, C, H, W)
    assert valid.shape == (B, 1, H, W)

    # Generation-aware VMEM budgeting (v7x: 64 MiB/TC, v5e/v6e: 128 MiB).
    vmem_cap = _vmem_capacity_bytes()
    budget = min(int(vmem_cap * 0.45), 48 << 20)
    vmem_limit = min(int(vmem_cap * 0.75), 64 << 20)

    th = _pick_tile_h(H, W, B, C,
                      jnp.dtype(flow_preds.dtype).itemsize,
                      jnp.dtype(flow_gt.dtype).itemsize,
                      jnp.dtype(valid.dtype).itemsize,
                      budget)
    n_h = _cdiv(H, th)

    # gamma^(N-1-i); 1/numel is applied once to the final sum (better f32
    # accumulation than scaling every addend inside the kernel).
    weights = jnp.float32(gamma) ** jnp.arange(N - 1, -1, -1, dtype=jnp.float32)

    kernel = functools.partial(_sequence_loss_kernel,
                               max_flow_sq=float(max_flow) ** 2,
                               h_total=H, tile_h=th)

    partials = pl.pallas_call(
        kernel,
        out_shape=jax.ShapeDtypeStruct((n_h, 8, 128), jnp.float32),
        grid_spec=pltpu.PrefetchScalarGridSpec(
            num_scalar_prefetch=1,
            grid=(n_h, N),                      # H tiles outer, predictions inner
            in_specs=[
                pl.BlockSpec((1, B, C, th, W), lambda h, n, w: (n, 0, 0, h, 0)),
                pl.BlockSpec((B, C, th, W),    lambda h, n, w: (0, 0, h, 0)),
                pl.BlockSpec((B, 1, th, W),    lambda h, n, w: (0, 0, h, 0)),
            ],
            out_specs=pl.BlockSpec((1, 8, 128), lambda h, n, w: (h, 0, 0)),
            scratch_shapes=[
                pltpu.VMEM((B, 1, th, W), jnp.float32),   # hoisted valid mask
                pltpu.VMEM((8, 128), jnp.float32),        # per-tile accumulator
            ],
        ),
        compiler_params=pltpu.CompilerParams(
            dimension_semantics=("parallel", "arbitrary"),
            vmem_limit_bytes=vmem_limit,
        ),
    )(weights, flow_preds, flow_gt, valid)

    # Each tile's (gamma-weighted) partial sum is broadcast over an (8,128)
    # slab; reduce the tiny per-tile array and normalize once in plain JAX.
    return jnp.sum(partials[:, 0, 0]) / jnp.float32(B * C * H * W)


if __name__ == "__main__":
    key = jax.random.PRNGKey(0)
    B, H, W, N = 2, 16, 16, 3
    GAMMA, MAX_FLOW = 0.8, 400.0

    k1, k2, k3 = jax.random.split(key, 3)
    # Mirror the module's inputs (NCHW, torch-style dict structure).
    outputs = {
        "flow_preds": [
            jax.random.normal(jax.random.fold_in(k1, i), (B, 2, H, W),
                              jnp.float32) * 5.0
            for i in range(N)
        ]
    }
    inputs = {
        "flows": jax.random.normal(k2, (B, 1, 2, H, W), jnp.float32) * 5.0,
        "valids": (jax.random.uniform(k3, (B, 1, 1, H, W))
                   > 0.3).astype(jnp.float32),
    }

    # Same indexing the torch forward does, then call the kernel.
    flow_gt = inputs["flows"][:, 0]                      # (B, 2, H, W)
    valid = inputs["valids"][:, 0]                       # (B, 1, H, W)
    preds_stacked = jnp.stack(outputs["flow_preds"], 0)  # (N, B, 2, H, W)

    loss = sequence_loss_pallas(preds_stacked, flow_gt, valid,
                                gamma=GAMMA, max_flow=MAX_FLOW)
    loss = jax.block_until_ready(loss)

    # Pure-JAX reference for correctness.
    mag = jnp.sqrt(jnp.sum(flow_gt ** 2, axis=1, keepdims=True))
    vmask = ((valid >= 0.5) & (mag < MAX_FLOW)).astype(jnp.float32)
    ref = 0.0
    for i in range(N):
        w_i = GAMMA ** (N - i - 1)
        ref += w_i * jnp.mean(vmask * jnp.abs(outputs["flow_preds"][i] - flow_gt))

    err = abs(float(loss) - float(ref))
    assert err <= 1e-4 * max(1.0, abs(float(ref))), (float(loss), float(ref))
    print("KERNEL_OK")
</pallas_src>

<mosaic_0001>
module attributes {stable_mosaic.version = 11 : i64} {
  func.func @_sequence_loss_kernel(%arg0: i32, %arg1: i32, %arg2: memref<3xf32, #tpu.memory_space<smem>>, %arg3: memref<1x2x2x8x16xf32, #tpu.memory_space<vmem>>, %arg4: memref<2x2x8x16xf32, #tpu.memory_space<vmem>>, %arg5: memref<2x1x8x16xf32, #tpu.memory_space<vmem>>, %arg6: memref<1x8x128xf32, #tpu.memory_space<vmem>>, %arg7: memref<2x1x8x16xf32, #tpu.memory_space<vmem>>, %arg8: memref<8x128xf32, #tpu.memory_space<vmem>>) attributes {dimension_semantics = [#tpu.dimension_semantics<parallel>, #tpu.dimension_semantics<arbitrary>], iteration_bounds = array<i64: 2, 3>, scalar_prefetch = 1 : i64, scratch_operands = 2 : i64, tpu.core_type = #tpu.core_type<tc>, window_params = [{transform_indices = @transform_0, window_bounds = array<i64: 1, 2, 2, 8, 16>}, {transform_indices = @transform_1, window_bounds = array<i64: 2, 2, 8, 16>}, {transform_indices = @transform_2, window_bounds = array<i64: 2, 1, 8, 16>}, {transform_indices = @transform_3, window_bounds = array<i64: 1, 8, 128>}]} {
    %c0_i32 = arith.constant 0 : i32
    %0 = arith.cmpi eq, %arg1, %c0_i32 : i32
    %1 = arith.extui %0 : i1 to i32
    %c0_i32_0 = arith.constant 0 : i32
    %2 = arith.cmpi ne, %1, %c0_i32_0 : i32
    scf.if %2 {
      %c0_20 = arith.constant 0 : index
      %c0_21 = arith.constant 0 : index
      %c0_22 = arith.constant 0 : index
      %c0_23 = arith.constant 0 : index
      %29 = vector.load %arg4[%c0_20, %c0_21, %c0_22, %c0_23] : memref<2x2x8x16xf32, #tpu.memory_space<vmem>>, vector<2x2x8x16xf32>
      %30 = arith.mulf %29, %29 : vector<2x2x8x16xf32>
      %cst_24 = arith.constant dense<0.000000e+00> : vector<2x8x16xf32>
      %31 = vector.multi_reduction <add>, %30, %cst_24 [1] : vector<2x2x8x16xf32> to vector<2x8x16xf32>
      %32 = vector.shape_cast %31 : vector<2x8x16xf32> to vector<2x1x8x16xf32>
      %c0_25 = arith.constant 0 : index
      %c0_26 = arith.constant 0 : index
      %c0_27 = arith.constant 0 : index
      %c0_28 = arith.constant 0 : index
      %33 = vector.load %arg5[%c0_25, %c0_26, %c0_27, %c0_28] : memref<2x1x8x16xf32, #tpu.memory_space<vmem>>, vector<2x1x8x16xf32>
      %cst_29 = arith.constant 5.000000e-01 : f32
      %34 = vector.broadcast %cst_29 : f32 to vector<2x1x8x16xf32>
      %35 = arith.cmpf oge, %33, %34 : vector<2x1x8x16xf32>
      %cst_30 = arith.constant 1.600000e+05 : f32
      %36 = vector.broadcast %cst_30 : f32 to vector<2x1x8x16xf32>
      %37 = arith.cmpf olt, %32, %36 : vector<2x1x8x16xf32>
      %38 = arith.andi %35, %37 : vector<2x1x8x16xi1>
      %39 = tpu.iota {dimensions = array<i32: 0>} : vector<8x16xi32>
      %c8_i32 = arith.constant 8 : i32
      %40 = arith.muli %arg0, %c8_i32 : i32
      %41 = vector.broadcast %40 : i32 to vector<8x16xi32>
      %42 = arith.addi %39, %41 : vector<8x16xi32>
      %c16_i32 = arith.constant 16 : i32
      %43 = vector.broadcast %c16_i32 : i32 to vector<8x16xi32>
      %44 = arith.cmpi slt, %42, %43 : vector<8x16xi32>
      %45 = vector.shape_cast %44 : vector<8x16xi1> to vector<1x1x8x16xi1>
      %46 = vector.broadcast %45 : vector<1x1x8x16xi1> to vector<2x1x8x16xi1>
      %47 = arith.andi %38, %46 : vector<2x1x8x16xi1>
      %48 = arith.extui %47 : vector<2x1x8x16xi1> to vector<2x1x8x16xi32>
      %49 = arith.sitofp %48 : vector<2x1x8x16xi32> to vector<2x1x8x16xf32>
      %c0_31 = arith.constant 0 : index
      %c0_32 = arith.constant 0 : index
      %c0_33 = arith.constant 0 : index
      %c0_34 = arith.constant 0 : index
      %50 = vector.load %arg7[%c0_31, %c0_32, %c0_33, %c0_34] : memref<2x1x8x16xf32, #tpu.memory_space<vmem>>, vector<2x1x8x16xf32>
      tpu.vector_store %arg7[%c0_31, %c0_32, %c0_33, %c0_34], %49 {strides = array<i32>} : memref<2x1x8x16xf32, #tpu.memory_space<vmem>>, vector<2x1x8x16xf32>,
      %cst_35 = arith.constant 0.000000e+00 : f32
      %51 = vector.broadcast %cst_35 : f32 to vector<8x128xf32>
      %c0_36 = arith.constant 0 : index
      %c0_37 = arith.constant 0 : index
      %52 = vector.load %arg8[%c0_36, %c0_37] : memref<8x128xf32, #tpu.memory_space<vmem>>, vector<8x128xf32>
      tpu.vector_store %arg8[%c0_36, %c0_37], %51 {strides = array<i32>} : memref<8x128xf32, #tpu.memory_space<vmem>>, vector<8x128xf32>,
    } else {
    }
    %c0 = arith.constant 0 : index
    %c0_1 = arith.constant 0 : index
    %c0_2 = arith.constant 0 : index
    %c0_3 = arith.constant 0 : index
    %c0_4 = arith.constant 0 : index
    %3 = vector.load %arg3[%c0, %c0_1, %c0_2, %c0_3, %c0_4] : memref<1x2x2x8x16xf32, #tpu.memory_space<vmem>>, vector<1x2x2x8x16xf32>
    %4 = vector.shape_cast %3 : vector<1x2x2x8x16xf32> to vector<2x2x8x16xf32>
    %c0_5 = arith.constant 0 : index
    %c0_6 = arith.constant 0 : index
    %c0_7 = arith.constant 0 : index
    %c0_8 = arith.constant 0 : index
    %5 = vector.load %arg4[%c0_5, %c0_6, %c0_7, %c0_8] : memref<2x2x8x16xf32, #tpu.memory_space<vmem>>, vector<2x2x8x16xf32>
    %6 = arith.subf %4, %5 : vector<2x2x8x16xf32>
    %7 = math.absf %6 : vector<2x2x8x16xf32>
    %c0_9 = arith.constant 0 : index
    %c0_10 = arith.constant 0 : index
    %c0_11 = arith.constant 0 : index
    %c0_12 = arith.constant 0 : index
    %8 = vector.load %arg7[%c0_9, %c0_10, %c0_11, %c0_12] : memref<2x1x8x16xf32, #tpu.memory_space<vmem>>, vector<2x1x8x16xf32>
    %cst = arith.constant 0.000000e+00 : f32
    %9 = vector.broadcast %cst : f32 to vector<2x1x8x16xf32>
    %10 = arith.cmpf ogt, %8, %9 : vector<2x1x8x16xf32>
    %cst_13 = arith.constant 0.000000e+00 : f32
    %11 = vector.shape_cast %10 : vector<2x1x8x16xi1> to vector<2x1x8x16xi1>
    %12 = vector.broadcast %11 : vector<2x1x8x16xi1> to vector<2x2x8x16xi1>
    %13 = vector.broadcast %cst_13 : f32 to vector<2x2x8x16xf32>
    %14 = arith.select %12, %7, %13 : vector<2x2x8x16xi1>, vector<2x2x8x16xf32>
    %c0_14 = arith.constant 0 : index
    %c0_15 = arith.constant 0 : index
    %15 = vector.load %arg8[%c0_14, %c0_15] : memref<8x128xf32, #tpu.memory_space<vmem>>, vector<8x128xf32>
    %16 = arith.index_cast %arg1 : i32 to index
    %17 = memref.load %arg2[%16] : memref<3xf32, #tpu.memory_space<smem>>
    %18 = vector.shape_cast %14 : vector<2x2x8x16xf32> to vector<1x2x2x8x16xf32>
    %cst_16 = arith.constant dense<0.000000e+00> : vector<1xf32>
    %19 = vector.multi_reduction <add>, %18, %cst_16 [1, 2, 3, 4] : vector<1x2x2x8x16xf32> to vector<1xf32>
    %20 = vector.shape_cast %19 : vector<1xf32> to vector<1x1x1x1x1xf32>
    %21 = vector.extract %20[0, 0, 0, 0, 0] : f32 from vector<1x1x1x1x1xf32>
    %22 = arith.mulf %17, %21 : f32
    %23 = vector.broadcast %22 : f32 to vector<8x128xf32>
    %24 = arith.addf %15, %23 : vector<8x128xf32>
    %c0_17 = arith.constant 0 : index
    %c0_18 = arith.constant 0 : index
    %25 = vector.load %arg8[%c0_17, %c0_18] : memref<8x128xf32, #tpu.memory_space<vmem>>, vector<8x128xf32>
    tpu.vector_store %arg8[%c0_17, %c0_18], %24 {strides = array<i32>} : memref<8x128xf32, #tpu.memory_space<vmem>>, vector<8x128xf32>,
    %c2_i32 = arith.constant 2 : i32
    %26 = arith.cmpi eq, %arg1, %c2_i32 : i32
    %27 = arith.extui %26 : i1 to i32
    %c0_i32_19 = arith.constant 0 : i32
    %28 = arith.cmpi ne, %27, %c0_i32_19 : i32
    scf.if %28 {
      %c0_20 = arith.constant 0 : index
      %c0_21 = arith.constant 0 : index
      %29 = vector.load %arg8[%c0_20, %c0_21] : memref<8x128xf32, #tpu.memory_space<vmem>>, vector<8x128xf32>
      %c0_22 = arith.constant 0 : index
      %c0_23 = arith.constant 0 : index
      %c0_24 = arith.constant 0 : index
      %30 = vector.load %arg6[%c0_22, %c0_23, %c0_24] : memref<1x8x128xf32, #tpu.memory_space<vmem>>, vector<1x8x128xf32>
      %31 = vector.shape_cast %30 : vector<1x8x128xf32> to vector<8x128xf32>
      %32 = vector.shape_cast %29 : vector<8x128xf32> to vector<1x8x128xf32>
      tpu.vector_store %arg6[%c0_22, %c0_23, %c0_24], %32 {strides = array<i32>} : memref<1x8x128xf32, #tpu.memory_space<vmem>>, vector<1x8x128xf32>,
    } else {
    }
    return
  }
  func.func @transform_0(%arg0: i32, %arg1: i32, %arg2: memref<3xf32, #tpu.memory_space<smem>>) -> (i32, i32, i32, i32, i32) {
    %c0_i32 = arith.constant 0 : i32
    %c0_i32_0 = arith.constant 0 : i32
    %c0_i32_1 = arith.constant 0 : i32
    %c0_i32_2 = arith.constant 0 : i32
    return %arg1, %c0_i32, %c0_i32_0, %arg0, %c0_i32_1 : i32, i32, i32, i32, i32
  }
  func.func @transform_1(%arg0: i32, %arg1: i32, %arg2: memref<3xf32, #tpu.memory_space<smem>>) -> (i32, i32, i32, i32) {
    %c0_i32 = arith.constant 0 : i32
    %c0_i32_0 = arith.constant 0 : i32
    %c0_i32_1 = arith.constant 0 : i32
    %c0_i32_2 = arith.constant 0 : i32
    return %c0_i32, %c0_i32_0, %arg0, %c0_i32_1 : i32, i32, i32, i32
  }
  func.func @transform_2(%arg0: i32, %arg1: i32, %arg2: memref<3xf32, #tpu.memory_space<smem>>) -> (i32, i32, i32, i32) {
    %c0_i32 = arith.constant 0 : i32
    %c0_i32_0 = arith.constant 0 : i32
    %c0_i32_1 = arith.constant 0 : i32
    %c0_i32_2 = arith.constant 0 : i32
    return %c0_i32, %c0_i32_0, %arg0, %c0_i32_1 : i32, i32, i32, i32
  }
  func.func @transform_3(%arg0: i32, %arg1: i32, %arg2: memref<3xf32, #tpu.memory_space<smem>>) -> (i32, i32, i32) {
    %c0_i32 = arith.constant 0 : i32
    %c0_i32_0 = arith.constant 0 : i32
    %c0_i32_1 = arith.constant 0 : i32
    return %arg0, %c0_i32, %c0_i32_0 : i32, i32, i32
  }
}

</mosaic_0001>

<llo_original>
// kernel: tpu_custom_call.1
$region0: #{tpu_custom_call.1}
  #allocation0 [shape = 'u32[]', space=smem, size = 0x4, offset = 0x4, fixed_abs, tag = 'smem constant byte address 0x4 - core index']
  #allocation1 [shape = 'u32[144,128]{1,0:T(1,128)}', space=vmem, size = 0x12000, scoped, tag = 'internal scratch']
  #allocation2 [shape = 'f32[2,1,8,16]{3,2,1,0:T(8,128)}', space=vmem, size = 0x2000, scoped, tag = 'scratch operand']
  #allocation3 [shape = 'f32[8,128]{1,0:T(8,128)}', space=vmem, size = 0x1000, scoped, tag = 'scratch operand']
  #allocation4 [shape = 's32[1]{0}', space=sflag, size = 0x4, scoped, tag = 'scoped memory for tpu_custom_call.1']
  #allocation5 [shape = 'u8[512]{0}', space=smem, size = 0x200, scoped, tag = 'prefetched SMEM operand 0']
  %s0 = inlined_call_operand.hbm [shape: f32[3], index: 0, kind: input, shape index: {}]
  %s1 = inlined_call_operand.hbm [shape: f32[3,2,2,16,16], index: 1, kind: input, shape index: {}]
  %s2 = inlined_call_operand.hbm [shape: f32[2,2,16,16], index: 2, kind: input, shape index: {}]
  %s3 = inlined_call_operand.hbm [shape: f32[2,1,16,16], index: 3, kind: input, shape index: {}]
  %s4 = inlined_call_operand.hbm [shape: f32[2,8,128], index: 4, kind: output, shape index: {}]
  %s5 = sld [smem:[#allocation0]]
  $region65: #{tpu_custom_call.1} parent=0
    _
  %s7 = ssub.s32 1, %s5
  %s8 = scalar_select 0, %s7, %s5
  %10 = dma.hbm_to_smem %s0, 16, [#allocation5], [#allocation4]
  %11 = dma.done [#allocation4], 16
  %12 = sfence
  $region1: #{tpu_custom_call.1} parent=0
    #allocation6 [shape = 'u8[32768]{0}', space=vmem, size = 0x8000, scoped, tag = 'input window, operand 1']
    #allocation7 [shape = 's32[2]{0}', space=sflag, size = 0x8, scoped, tag = 'scoped memory for tpu_custom_call.1']
    #allocation8 [shape = 's32[2]{0}', space=sflag, size = 0x8, scoped, tag = 'scoped memory for tpu_custom_call.1']
    #allocation9 [shape = 'u8[32768]{0}', space=vmem, size = 0x8000, scoped, tag = 'input window, operand 2']
    #allocation10 [shape = 's32[2]{0}', space=sflag, size = 0x8, scoped, tag = 'scoped memory for tpu_custom_call.1']
    #allocation11 [shape = 'u8[16384]{0}', space=vmem, size = 0x4000, scoped, tag = 'input window, operand 3']
    #allocation12 [shape = 'u8[8192]{0}', space=vmem, size = 0x2000, scoped, tag = 'output window, operand 0']
    %13 = vsyncpa [#allocation7], 0
    %s14 = scalar_lea.sflag [#allocation7], 1
    %15 = vsyncpa %s14, 0
    %16 = vsyncpa [#allocation10], 0
    %s17 = scalar_lea.sflag [#allocation10], 1
    %18 = vsyncpa %s17, 0
    %19 = vsyncpa [#allocation8], 0
    %s20 = scalar_lea.sflag [#allocation8], 1
    %21 = vsyncpa %s20, 0
    loop: start=0, step=1, limit=8
    $region2: #{tpu_custom_call.1} parent=1 // loop_pre_header
      _
    $region3: #{tpu_custom_call.1} parent=1 // loop_header
      %s23 = sphi 0, %s27
      %p24 = scmp.ge.s32.totalorder %s23, 8
      %s30 = sphi 0, %s42
      %s31 = sphi 0, %s38
      %s32 = sphi 0, %s30
      %s33 = sphi 0, %s31
      %s34 = sphi 0, %s32
      %s35 = sphi 0, %s33
      %s47 = sphi 0, %s49
      %s50 = sphi 0, %s47
      %s51 = sphi 0, %s50
      %s67 = sphi 0, %s51
      %s73 = sphi 0, %s75
      %s76 = sphi 0, %s73
      %s77 = sphi 0, %s76
      %s93 = sphi 0, %s77
      %s99 = sphi 0, %s101
      %s102 = sphi 0, %s99
      %s103 = sphi 0, %s102
      %s119 = sphi 0, %s103
      %s125 = sphi 0, %s127
      %s128 = sphi 0, %s125
      %s129 = sphi 0, %s128
      %s145 = sphi 0, %s129
    $region4: #{tpu_custom_call.1} parent=1 // loop_header_branch
      %26 = sbr.rel (%p24) target = $region8
    $region5: #{tpu_custom_call.1} parent=1 // loop_body
      %s28 = ssub.s32 %s23, 1
      %s29 = ssub.s32 %s23, 2
      %s36 = sadd.s32 1, %s31
      %p37 = scmp.ge.s32.totalorder %s36, 3
      %s38 = scalar_select %p37, 0, %s36
      %s39 = sadd.s32 1, %s30
      %s40 = scalar_select %p37, %s39, %s30
      %p41 = scmp.ge.s32.totalorder %s40, 2
      %s42 = scalar_select %p41, 0, %s40
      %s43 = ssub.s32 %s31, %s38
      %s44 = ssub.s32 %s30, %s42
      %s45 = sor.u32 %s43, %s44
      %p46 = scmp.eq.s32.totalorder %s45, 0
      %s48 = sadd.s32 %s47, 1
      %s49 = scalar_select %p46, %s47, %s48
      %p52 = pneg %p46
      %p53 = scmp.eq.s32.totalorder %s23, 5
      %p54 = por %p52, %p53
      %p55 = scmp.ne.s32.totalorder %s47, %s50
      %p56 = scmp.eq.s32.totalorder %s23, 0
      %p57 = por %p55, %p56
      %p58 = scmp.ne.s32.totalorder %s47, %s50
      %p59 = scmp.eq.s32.totalorder %s28, 5
      %p60 = por %p58, %p59
      %p61 = scmp.ne.s32.totalorder %s50, %s51
      %p62 = scmp.eq.s32.totalorder %s28, 0
      %p63 = por %p61, %p62
      %p64 = scmp.ne.s32.totalorder %s50, %s51
      %p65 = scmp.eq.s32.totalorder %s29, 5
      %p66 = por %p64, %p65
      %p68 = scmp.ne.s32.totalorder %s51, %s67
      %p69 = scmp.eq.s32.totalorder %s29, 0
      %p70 = por %p68, %p69
      %s71 = ssub.s32 %s30, %s42
      %p72 = scmp.eq.s32.totalorder %s71, 0
      %s74 = sadd.s32 %s73, 1
      %s75 = scalar_select %p72, %s73, %s74
      %p78 = pneg %p72
      %p79 = scmp.eq.s32.totalorder %s23, 5
      %p80 = por %p78, %p79
      %p81 = scmp.ne.s32.totalorder %s73, %s76
      %p82 = scmp.eq.s32.totalorder %s23, 0
      %p83 = por %p81, %p82
      %p84 = scmp.ne.s32.totalorder %s73, %s76
      %p85 = scmp.eq.s32.totalorder %s28, 5
      %p86 = por %p84, %p85
      %p87 = scmp.ne.s32.totalorder %s76, %s77
      %p88 = scmp.eq.s32.totalorder %s28, 0
      %p89 = por %p87, %p88
      %p90 = scmp.ne.s32.totalorder %s76, %s77
      %p91 = scmp.eq.s32.totalorder %s29, 5
      %p92 = por %p90, %p91
      %p94 = scmp.ne.s32.totalorder %s77, %s93
      %p95 = scmp.eq.s32.totalorder %s29, 0
      %p96 = por %p94, %p95
      %s97 = ssub.s32 %s30, %s42
      %p98 = scmp.eq.s32.totalorder %s97, 0
      %s100 = sadd.s32 %s99, 1
      %s101 = scalar_select %p98, %s99, %s100
      %p104 = pneg %p98
      %p105 = scmp.eq.s32.totalorder %s23, 5
      %p106 = por %p104, %p105
      %p107 = scmp.ne.s32.totalorder %s99, %s102
      %p108 = scmp.eq.s32.totalorder %s23, 0
      %p109 = por %p107, %p108
      %p110 = scmp.ne.s32.totalorder %s99, %s102
      %p111 = scmp.eq.s32.totalorder %s28, 5
      %p112 = por %p110, %p111
      %p113 = scmp.ne.s32.totalorder %s102, %s103
      %p114 = scmp.eq.s32.totalorder %s28, 0
      %p115 = por %p113, %p114
      %p116 = scmp.ne.s32.totalorder %s102, %s103
      %p117 = scmp.eq.s32.totalorder %s29, 5
      %p118 = por %p116, %p117
      %p120 = scmp.ne.s32.totalorder %s103, %s119
      %p121 = scmp.eq.s32.totalorder %s29, 0
      %p122 = por %p120, %p121
      %s123 = ssub.s32 %s30, %s42
      %p124 = scmp.eq.s32.totalorder %s123, 0
      %s126 = sadd.s32 %s125, 1
      %s127 = scalar_select %p124, %s125, %s126
      %p130 = pneg %p124
      %p131 = scmp.eq.s32.totalorder %s23, 5
      %p132 = por %p130, %p131
      %p133 = scmp.ne.s32.totalorder %s125, %s128
      %p134 = scmp.eq.s32.totalorder %s23, 0
      %p135 = por %p133, %p134
      %p136 = scmp.ne.s32.totalorder %s125, %s128
      %p137 = scmp.eq.s32.totalorder %s28, 5
      %p138 = por %p136, %p137
      %p139 = scmp.ne.s32.totalorder %s128, %s129
      %p140 = scmp.eq.s32.totalorder %s28, 0
      %p141 = por %p139, %p140
      %p142 = scmp.ne.s32.totalorder %s128, %s129
      %p143 = scmp.eq.s32.totalorder %s29, 5
      %p144 = por %p142, %p143
      %p146 = scmp.ne.s32.totalorder %s129, %s145
      %p147 = scmp.eq.s32.totalorder %s29, 0
      %p148 = por %p146, %p147
      %p149 = scmp.le.s32.totalorder 1, %s23
      %p150 = scmp.lt.s32.totalorder %s23, 7
      %p151 = pnand %p149, %p150
      %p152 = pneg %p151
      // Predicated region
      $region9: #{tpu_custom_call.1} parent=5 // pred_check
        _
      $region10: #{tpu_custom_call.1} parent=5 // pred_check_branch
        %154 = sbr.rel (%p151) target = $region12
      $region11: #{tpu_custom_call.1} parent=5 // pred_region
        %s155 = ssub.s32 %s23, 1
      $region12: #{tpu_custom_call.1} parent=5 // pred_fallthru
        _
      %p156 = scmp.lt.s32.totalorder %s23, 6
      // Predicated region
      $region13: #{tpu_custom_call.1} parent=5 // pred_check
        %p157 = pneg %p156
      $region14: #{tpu_custom_call.1} parent=5 // pred_check_branch
        %159 = sbr.rel (%p157) target = $region16
      $region15: #{tpu_custom_call.1} parent=5 // pred_region
        // Predicated region
        $region17: #{tpu_custom_call.1} parent=15 // pred_check
          %p160 = pneg %p57
        $region18: #{tpu_custom_call.1} parent=15 // pred_check_branch
          %162 = sbr.rel (%p160) target = $region20
        $region19: #{tpu_custom_call.1} parent=15 // pred_region
          %s163 = sand.u32 %s47, 1
          %s164 = scalar_lea.sflag [#allocation7], %s163
          %s165 = sand.u32 %s47, 1
          %s166 = smul.addr %s165, 32
          %s167 = scalar_lea.vmem [#allocation6], %s166
          %s169 = ssub.s32 512, 512
          %170 = vsyncadd %s164, %s169
          %s171 = smul.addr %s31, 8
          %s172 = sadd.s32 %s30, %s171
          %s173 = smul.addr %s172, 128
          %s174 = scalar_lea.hbm %s1, %s173
          %s175 = sshll.u32 %s167, 4
          %s176 = int_to_ptr.vmem [resolvable:$true] %s175
          %181 = dma.hbm_to_vmem [thread:$0]  %s174, 512, %s176, %s164, 256, 128, 8
        $region20: #{tpu_custom_call.1} parent=15 // pred_fallthru
          _
        // Predicated region
        $region21: #{tpu_custom_call.1} parent=15 // pred_check
          %p182 = pneg %p83
        $region22: #{tpu_custom_call.1} parent=15 // pred_check_branch
          %184 = sbr.rel (%p182) target = $region24
        $region23: #{tpu_custom_call.1} parent=15 // pred_region
          %s185 = sand.u32 %s23, 1
          %s186 = scalar_lea.sflag [#allocation10], %s185
          %s187 = sand.u32 %s73, 1
          %s188 = smul.addr %s187, 32
          %s189 = scalar_lea.vmem [#allocation9], %s188
          %s191 = ssub.s32 512, 512
          %192 = vsyncadd %s186, %s191
          %s193 = smul.addr %s30, 128
          %s194 = scalar_lea.hbm %s2, %s193
          %s195 = sshll.u32 %s189, 4
          %s196 = int_to_ptr.vmem [resolvable:$true] %s195
          %201 = dma.hbm_to_vmem [thread:$0]  %s194, 512, %s196, %s186, 256, 128, 8
        $region24: #{tpu_custom_call.1} parent=15 // pred_fallthru
          _
        // Predicated region
        $region25: #{tpu_custom_call.1} parent=15 // pred_check
          %p202 = pneg %p109
        $region26: #{tpu_custom_call.1} parent=15 // pred_check_branch
          %204 = sbr.rel (%p202) target = $region28
        $region27: #{tpu_custom_call.1} parent=15 // pred_region
          %s205 = sand.u32 %s23, 1
          %s206 = scalar_lea.sflag [#allocation10], %s205
          %s207 = sand.u32 %s99, 1
          %s208 = smul.addr %s207, 16
          %s209 = scalar_lea.vmem [#allocation11], %s208
          %s211 = ssub.s32 256, 256
          %212 = vsyncadd %s206, %s211
          %s213 = smul.addr %s30, 128
          %s214 = scalar_lea.hbm %s3, %s213
          %s215 = sshll.u32 %s209, 4
          %s216 = int_to_ptr.vmem [resolvable:$true] %s215
          %221 = dma.hbm_to_vmem [thread:$0]  %s214, 256, %s216, %s206, 256, 128, 8
        $region28: #{tpu_custom_call.1} parent=15 // pred_fallthru
          _
      $region16: #{tpu_custom_call.1} parent=5 // pred_fallthru
        _
      %p222 = scmp.le.s32.totalorder 1, %s23
      %p223 = scmp.lt.s32.totalorder %s23, 7
      %p224 = pnand %p222, %p223
      %p225 = pneg %p224
      // Predicated region
      $region29: #{tpu_custom_call.1} parent=5 // pred_check
        _
      $region30: #{tpu_custom_call.1} parent=5 // pred_check_branch
        %227 = sbr.rel (%p224) target = $region32
      $region31: #{tpu_custom_call.1} parent=5 // pred_region
        %s228 = ssub.s32 %s23, 1
        %s229 = sand.u32 %s50, 1
        %s230 = scalar_lea.sflag [#allocation7], %s229
        %s231 = sand.u32 %s50, 1
        %s232 = smul.addr %s231, 32
        %s233 = scalar_lea.vmem [#allocation6], %s232
        // Predicated region
        $region33: #{tpu_custom_call.1} parent=31 // pred_check
          %p234 = pneg %p63
        $region34: #{tpu_custom_call.1} parent=31 // pred_check_branch
          %236 = sbr.rel (%p234) target = $region36
        $region35: #{tpu_custom_call.1} parent=31 // pred_region
          %237 = dma.done %s230, 512
        $region36: #{tpu_custom_call.1} parent=31 // pred_fallthru
          _
        %s238 = sand.u32 %s28, 1
        %s239 = scalar_lea.sflag [#allocation10], %s238
        %s240 = sand.u32 %s76, 1
        %s241 = smul.addr %s240, 32
        %s242 = scalar_lea.vmem [#allocation9], %s241
        // Predicated region
        $region37: #{tpu_custom_call.1} parent=31 // pred_check
          %p243 = pneg %p89
        $region38: #{tpu_custom_call.1} parent=31 // pred_check_branch
          %245 = sbr.rel (%p243) target = $region40
        $region39: #{tpu_custom_call.1} parent=31 // pred_region
          %246 = dma.done %s239, 512
        $region40: #{tpu_custom_call.1} parent=31 // pred_fallthru
          _
        %s247 = sand.u32 %s28, 1
        %s248 = scalar_lea.sflag [#allocation10], %s247
        %s249 = sand.u32 %s102, 1
        %s250 = smul.addr %s249, 16
        %s251 = scalar_lea.vmem [#allocation11], %s250
        // Predicated region
        $region41: #{tpu_custom_call.1} parent=31 // pred_check
          %p252 = pneg %p115
        $region42: #{tpu_custom_call.1} parent=31 // pred_check_branch
          %254 = sbr.rel (%p252) target = $region44
        $region43: #{tpu_custom_call.1} parent=31 // pred_region
          %255 = dma.done %s248, 256
        $region44: #{tpu_custom_call.1} parent=31 // pred_fallthru
          _
        %s256 = sand.u32 %s50, 1
        %s257 = scalar_lea.sflag [#allocation7], %s256
        %s258 = sand.u32 %s50, 1
        %s259 = smul.addr %s258, 32
        %s260 = scalar_lea.vmem [#allocation6], %s259
        %p261 = pneg %p63
        %p262 = pneg %p60
        %s263 = sand.u32 %s28, 1
        %s264 = scalar_lea.sflag [#allocation10], %s263
        %s265 = sand.u32 %s76, 1
        %s266 = smul.addr %s265, 32
        %s267 = scalar_lea.vmem [#allocation9], %s266
        %p268 = pneg %p89
        %p269 = pneg %p86
        %s270 = sand.u32 %s28, 1
        %s271 = scalar_lea.sflag [#allocation10], %s270
        %s272 = sand.u32 %s102, 1
        %s273 = smul.addr %s272, 16
        %s274 = scalar_lea.vmem [#allocation11], %s273
        %p275 = pneg %p115
        %p276 = pneg %p112
        %p277 = pneg %p141
        %p278 = pneg %p138
        %s279 = sand.u32 %s128, 1
        %s280 = scalar_lea.sflag [#allocation8], %s279
        %s281 = sand.u32 %s128, 1
        %s282 = smul.addr %s281, 8
        %s283 = scalar_lea.vmem [#allocation12], %s282
        %p284 = scmp.eq.s32.totalorder %s33, 0
        // Predicated region
        $region45: #{tpu_custom_call.1} parent=31 // pred_check
          %p285 = pneg %p284
        $region46: #{tpu_custom_call.1} parent=31 // pred_check_branch
          %287 = sbr.rel (%p285) target = $region48
        $region47: #{tpu_custom_call.1} parent=31 // pred_region
          %v288 = vld [vmem:[%s242] sm:$0xff]
          %v289 = vld [vmem:[%s242 + $0x8] sm:$0xff]
          %v290 = vld [vmem:[%s242 + $0x10] sm:$0xff]
          %v291 = vld [vmem:[%s242 + $0x18] sm:$0xff]
          %v292 = vmul.f32 %v288, %v288
          %v293 = vmul.f32 %v289, %v289
          %v294 = vmul.f32 %v290, %v290
          %v295 = vmul.f32 %v291, %v291
          %vm296 = vcmask 130048
          %v297 = vsel %vm296, %v292, 0.0
          %v298 = vsel %vm296, %v293, 0.0
          %v299 = vadd.f32 %v297, %v298
          %v300 = vsel %vm296, %v294, 0.0
          %v301 = vsel %vm296, %v295, 0.0
          %v302 = vadd.f32 %v300, %v301
          %v303 = vld [vmem:[%s251] sm:$0xff]
          %v304 = vld [vmem:[%s251 + $0x8] sm:$0xff]
          %vm305 = vcmp.ge.f32.partialorder %v303, 0.5
          %vm306 = vcmp.ge.f32.partialorder %v304, 0.5
          %vm307 = vcmp.lt.f32.partialorder %v299, 160000.0
          %vm308 = vcmp.lt.f32.partialorder %v302, 160000.0
          %vm309 = vmand %vm305, %vm307
          %vm310 = vmand %vm306, %vm308
          %v311 = vlaneseq
          %v312 = vshrl.u32 %v311, 7
          %s313 = smul.u32 %s32, 8
          %v314 = vstv %s313
          %v315 = vadd.s32 %v312, %v314
          %vm316 = vcmp.lt.s32.totalorder %v315, 16
          %v317 = vsel %vm316, 1, 0
          %vm318 = vcmp.eq.s32.totalorder %v317, 1
          %vm319 = vmand %vm309, %vm318
          %vm320 = vmand %vm310, %vm318
          %v321 = vsel %vm319, 1, 0
          %v322 = vsel %vm320, 1, 0
          %v323 = vcvt.s32.f32 %v321
          %v324 = vcvt.s32.f32 %v322
          %325 = vst.msk [vmem:[#allocation2] sm:$0xff] %vm296, %v323
          %326 = vst.msk [vmem:[#allocation2 + $0x8] sm:$0xff] %vm296, %v324
          %327 = vst [vmem:[#allocation3] sm:$0xff] 0.0
        $region48: #{tpu_custom_call.1} parent=31 // pred_fallthru
          _
        %v328 = vld [vmem:[%s233] sm:$0xff]
        %v329 = vld [vmem:[%s233 + $0x8] sm:$0xff]
        %v330 = vld [vmem:[%s233 + $0x10] sm:$0xff]
        %v331 = vld [vmem:[%s233 + $0x18] sm:$0xff]
        %v332 = vld [vmem:[%s242] sm:$0xff]
        %v333 = vld [vmem:[%s242 + $0x8] sm:$0xff]
        %v334 = vld [vmem:[%s242 + $0x10] sm:$0xff]
        %v335 = vld [vmem:[%s242 + $0x18] sm:$0xff]
        %v336 = vsub.f32 %v328, %v332
        %v337 = vsub.f32 %v329, %v333
        %v338 = vsub.f32 %v330, %v334
        %v339 = vsub.f32 %v331, %v335
        %v340 = vand.u32 2147483647, %v336
        %v341 = vand.u32 2147483647, %v337
        %v342 = vand.u32 2147483647, %v338
        %v343 = vand.u32 2147483647, %v339
        %v344 = vld [vmem:[#allocation2] sm:$0xff]
        %v345 = vld [vmem:[#allocation2 + $0x8] sm:$0xff]
        %vm346 = vcmp.gt.f32.partialorder %v344, 0.0
        %vm347 = vcmp.gt.f32.partialorder %v345, 0.0
        %v348 = vsel %vm346, 1, 0
        %v349 = vsel %vm347, 1, 0
        %vm350 = vcmp.eq.s32.totalorder %v348, 1
        %vm351 = vcmp.eq.s32.totalorder %v349, 1
        %v352 = vsel %vm350, %v340, 0.0
        %v353 = vsel %vm350, %v341, 0.0
        %v354 = vsel %vm351, %v342, 0.0
        %v355 = vsel %vm351, %v343, 0.0
        %v356 = vld [vmem:[#allocation3] sm:$0xff]
        %s357 = sld [smem:[#allocation5 + %s33]]
        %vm358 = vcmask 130048
        %v359 = vsel %vm358, %v352, 0.0
        %v360 = vsel %vm358, %v353, 0.0
        %v361 = vadd.f32 %v359, %v360
        %v362 = vsel %vm358, %v354, 0.0
        %v363 = vadd.f32 %v361, %v362
        %v364 = vsel %vm358, %v355, 0.0
        %v365 = vadd.f32 %v363, %v364
        %366 = vadd.xlane.f32.xlu0 %v365
        %v367 = vpop.xlane.xlu0 %366
        %v368 = vrot.slane %v367, 4
        %v369 = vadd.f32 %v367, %v368
        %v370 = vrot.slane %v369, 2
        %v371 = vadd.f32 %v369, %v370
        %v372 = vrot.slane %v371, 1
        %v373 = vadd.f32 %v371, %v372
        %s374 = vtos %v373
        %s375 = smul.f32 %s357, %s374
        %v376 = vstv %s375
        %v377 = vadd.f32 %v356, %v376
        %378 = vst [vmem:[#allocation3] sm:$0xff] %v377
        %p379 = scmp.eq.s32.totalorder %s33, 2
        // Predicated region
        $region49: #{tpu_custom_call.1} parent=31 // pred_check
          %p380 = pneg %p379
        $region50: #{tpu_custom_call.1} parent=31 // pred_check_branch
          %382 = sbr.rel (%p380) target = $region52
        $region51: #{tpu_custom_call.1} parent=31 // pred_region
          %v383 = vld [vmem:[#allocation3] sm:$0xff]
          %384 = vst [vmem:[%s283] sm:$0xff] %v383
        $region52: #{tpu_custom_call.1} parent=31 // pred_fallthru
          _
        %s385 = sand.u32 %s128, 1
        %s386 = scalar_lea.sflag [#allocation8], %s385
        %s387 = sand.u32 %s128, 1
        %s388 = smul.addr %s387, 8
        %s389 = scalar_lea.vmem [#allocation12], %s388
        // Predicated region
        $region53: #{tpu_custom_call.1} parent=31 // pred_check
          %p390 = pneg %p138
        $region54: #{tpu_custom_call.1} parent=31 // pred_check_branch
          %392 = sbr.rel (%p390) target = $region56
        $region55: #{tpu_custom_call.1} parent=31 // pred_region
          %s394 = ssub.s32 128, 128
          %395 = vsyncadd %s386, %s394
          %s396 = smul.addr %s32, 128
          %s397 = scalar_lea.hbm %s4, %s396
          %s399 = sshll.u32 %s389, 4
          %s400 = int_to_ptr.vmem [resolvable:$true] %s399
          %402 = dma.vmem_to_hbm [thread:$0]  %s400, 128, %s397, %s386
        $region56: #{tpu_custom_call.1} parent=31 // pred_fallthru
          _
      $region32: #{tpu_custom_call.1} parent=5 // pred_fallthru
        _
      %p403 = scmp.le.s32.totalorder 2, %s23
      // Predicated region
      $region57: #{tpu_custom_call.1} parent=5 // pred_check
        %p404 = pneg %p403
      $region58: #{tpu_custom_call.1} parent=5 // pred_check_branch
        %406 = sbr.rel (%p404) target = $region60
      $region59: #{tpu_custom_call.1} parent=5 // pred_region
        %s407 = ssub.s32 %s23, 2
        // Predicated region
        $region61: #{tpu_custom_call.1} parent=59 // pred_check
          %p408 = pneg %p144
        $region62: #{tpu_custom_call.1} parent=59 // pred_check_branch
          %410 = sbr.rel (%p408) target = $region64
        $region63: #{tpu_custom_call.1} parent=59 // pred_region
          %s411 = sand.u32 %s129, 1
          %s412 = scalar_lea.sflag [#allocation8], %s411
          %s413 = sand.u32 %s129, 1
          %s414 = smul.addr %s413, 8
          %s415 = scalar_lea.vmem [#allocation12], %s414
          %416 = dma.done %s412, 128
        $region64: #{tpu_custom_call.1} parent=59 // pred_fallthru
          _
      $region60: #{tpu_custom_call.1} parent=5 // pred_fallthru
        _
    $region6: #{tpu_custom_call.1} parent=1 // loop_footer
      %s27 = sadd.s32 1, %s23
    $region7: #{tpu_custom_call.1} parent=1 // loop_footer_branch
      %22 = sbr.rel target = $region3
    $region8: #{tpu_custom_call.1} parent=1 // loop_exit
      _
    %417 = vsyncpa [#allocation7], 1
    %s418 = scalar_lea.sflag [#allocation7], 1
    %419 = vsyncpa %s418, 1
    %420 = vsyncpa [#allocation10], 1
    %s421 = scalar_lea.sflag [#allocation10], 1
    %422 = vsyncpa %s421, 1
    %423 = vsyncpa [#allocation8], 1
    %s424 = scalar_lea.sflag [#allocation8], 1
    %425 = vsyncpa %s424, 1

</llo_original>
